<compile_context>
chip_gen: v5e
topology: v5e:2x2
jax: 0.10.0
libtpu: 0.0.40
codegen_flags: <defaults>
</compile_context>

<pallas_src>
import functools

import jax
import jax.numpy as jnp
from jax import lax
from jax.experimental import pallas as pl
from jax.experimental.pallas import tpu as pltpu

EPS = 1e-5


def _basic_block_kernel(x_ref, nt_ref, nb_ref, w1_ref, w2_ref, bn_ref,
                        proj_ref, out_ref, *, N, H, W, C):
    """Whole residual block, single program, everything resident in VMEM.

    x_ref    : (N*H, W*C)     lane-packed NHWC input, f32 (skip stays exact)
    nt_ref   : (N*H, 1)       f32 {0,1}; 0 on the first row of each image
    nb_ref   : (N*H, 1)       f32 {0,1}; 0 on the last row of each image
    w*_ref   : (3, W*C, W*C)  per-dy block-Toeplitz conv weights, bf16
    bn_ref   : (4, W*C)       [gamma1, beta1, gamma2, beta2], lane-tiled, f32
    proj_ref : (W*C, W*C)     0/1 same-channel projector (reduce + broadcast)
    out_ref  : (N*H, W*C)     lane-packed NHWC output, f32
    """
    NH = N * H
    WC = W * C
    inv_count = 1.0 / float(N * H * W)

    not_top = nt_ref[...]                     # (NH, 1)
    not_bot = nb_ref[...]                     # (NH, 1)
    proj = proj_ref[...]                      # (WC, WC)

    def conv3x3(rows, w_ref):
        # rows: (NH, WC) f32.  dy taps = sublane rolls (XLU) masked by the
        # {0,1} halo columns (== zero padding in H); dx taps live in the
        # weight slabs.  bf16 operands, f32 MXU accumulation; three
        # accumulated K=WC dots instead of a materialized (NH, 3*WC) concat.
        up = pltpu.roll(rows, 1, axis=0) * not_top            # x[h-1]
        down = pltpu.roll(rows, NH - 1, axis=0) * not_bot     # x[h+1] (shift -1)
        acc = jnp.dot(rows.astype(jnp.bfloat16), w_ref[1],
                      preferred_element_type=jnp.float32)
        acc += jnp.dot(up.astype(jnp.bfloat16), w_ref[0],
                       preferred_element_type=jnp.float32)
        acc += jnp.dot(down.astype(jnp.bfloat16), w_ref[2],
                       preferred_element_type=jnp.float32)
        return acc                                            # (NH, WC) f32

    def batchnorm(acc, g_row, b_row):
        # Training-mode BN over (N, H, W).  Channels repeat with period C
        # along the packed lane axis: one stacked (2,WC)x(WC,WC) projector
        # matmul both sums the W lane copies and re-broadcasts per lane.
        # Normalize + affine folded into a single FMA over (NH, WC).
        col_sum = jnp.sum(acc, axis=0, keepdims=True)                  # (1, WC)
        col_sq = jnp.sum(acc * acc, axis=0, keepdims=True)             # (1, WC)
        mom = jnp.dot(jnp.concatenate([col_sum, col_sq], axis=0), proj,
                      preferred_element_type=jnp.float32) * inv_count  # (2, WC)
        mean_row = mom[0:1, :]
        var_row = mom[1:2, :] - mean_row * mean_row       # E[x^2] - mean^2
        scale_row = g_row * lax.rsqrt(var_row + EPS)
        shift_row = b_row - mean_row * scale_row
        return acc * scale_row + shift_row

    x = x_ref[...]                                        # (NH, WC) f32

    y = conv3x3(x, w1_ref)
    y = jnp.maximum(batchnorm(y, bn_ref[0:1, :], bn_ref[1:2, :]), 0.0)
    y = conv3x3(y, w2_ref)
    y = batchnorm(y, bn_ref[2:3, :], bn_ref[3:4, :])

    out_ref[...] = x + y                                  # residual skip


def _pack_conv3x3(w_oihw, W):
    """(Cout, Cin, 3, 3) -> (3, W*Cin, W*Cout) bf16 block-Toeplitz slabs.

    Tap dy: entry [dy, wq*Cin+ci, wo*Cout+co] = w[co, ci, dy, wq-wo+1]
    when |wq-wo| <= 1, else 0 (zero padding in W).
    """
    c_out, c_in, _, _ = w_oihw.shape
    taps = jnp.transpose(w_oihw, (2, 3, 1, 0)).astype(jnp.float32)  # (3,3,Ci,Co)
    wq = jnp.arange(W)[:, None]                    # source column
    wo = jnp.arange(W)[None, :]                    # output column
    d = wq - wo + 1                                # dx in {0,1,2} when valid
    valid = ((d >= 0) & (d <= 2)).astype(jnp.float32)
    dc = jnp.clip(d, 0, 2)
    blocks = []
    for dy in range(3):
        g = taps[dy][dc] * valid[:, :, None, None]          # (W, W, Ci, Co)
        blocks.append(
            jnp.transpose(g, (0, 2, 1, 3)).reshape(W * c_in, W * c_out))
    return jnp.stack(blocks, axis=0).astype(jnp.bfloat16)   # (3, W*Ci, W*Co)


def pack_params(w1_oihw, w2_oihw, g1, b1, g2, b2, W):
    """One-time parameter packing (hoisted out of the per-call forward)."""
    C = g1.shape[0]
    w1m = _pack_conv3x3(w1_oihw, W)
    w2m = _pack_conv3x3(w2_oihw, W)

    def tile_c(v):                                          # (C,) -> (1, W*C)
        return jnp.tile(v.reshape(1, C).astype(jnp.float32), (1, W))

    bn = jnp.concatenate([tile_c(g1), tile_c(b1), tile_c(g2), tile_c(b2)], 0)
    proj = jnp.tile(jnp.eye(C, dtype=jnp.float32), (W, W))  # (W*C, W*C)
    return w1m, w2m, bn, proj


@jax.jit
def basic_block(x_nchw, w1m, w2m, bn, proj):
    """x_nchw: (N, C, H, W) f32 -- matches the PyTorch module's input."""
    N, C, H, W = x_nchw.shape
    WC = W * C
    NH = N * H

    # NCHW -> lane-packed (N*H, W*C) slab.  (An NHWC-native model would drop
    # these wrapper transposes entirely.)
    x2d = jnp.transpose(x_nchw, (0, 2, 3, 1)).astype(jnp.float32).reshape(NH, WC)

    # {0,1} halo columns for the dy taps (zero padding in H) -- one vreg column
    # each instead of full (NH, WC) boolean masks held live in the kernel.
    row = jnp.arange(NH, dtype=jnp.int32) % H
    not_top = (row != 0).astype(jnp.float32).reshape(NH, 1)
    not_bot = (row != H - 1).astype(jnp.float32).reshape(NH, 1)

    kernel = functools.partial(_basic_block_kernel, N=N, H=H, W=W, C=C)
    vmem = pl.BlockSpec(memory_space=pltpu.MemorySpace.VMEM)
    out2d = pl.pallas_call(
        kernel,
        out_shape=jax.ShapeDtypeStruct((NH, WC), jnp.float32),
        in_specs=[vmem] * 7,
        out_specs=vmem,
    )(x2d, not_top, not_bot, w1m, w2m, bn, proj)

    return jnp.transpose(out2d.reshape(N, H, W, C), (0, 3, 1, 2))


def _reference(x, w1, w2, g1, b1, g2, b2):
    """Plain-JAX reference of the PyTorch forward (NCHW, training-mode BN)."""
    def conv(y, w):
        return lax.conv_general_dilated(
            y, w, window_strides=(1, 1), padding=((1, 1), (1, 1)),
            dimension_numbers=("NCHW", "OIHW", "NCHW"))

    def bn(y, g, b):
        mean = y.mean(axis=(0, 2, 3), keepdims=True)
        var = jnp.square(y - mean).mean(axis=(0, 2, 3), keepdims=True)
        return ((y - mean) * lax.rsqrt(var + EPS)
                * g.reshape(1, -1, 1, 1) + b.reshape(1, -1, 1, 1))

    y = conv(x, w1)
    y = jnp.maximum(bn(y, g1, b1), 0.0)
    y = conv(y, w2)
    y = bn(y, g2, b2)
    return x + y


if __name__ == "__main__":
    # BasicBlock(filters=8) on a batch of 2 feature maps of 16x16
    # (W*C = 128 -> exactly one lane-dense vreg row per spatial row).
    N, C, H, W = 2, 8, 16, 16

    key = jax.random.PRNGKey(0)
    kx, kw1, kw2, kg1, kb1, kg2, kb2 = jax.random.split(key, 7)

    x = jax.random.normal(kx, (N, C, H, W), jnp.float32)
    w1 = jax.random.normal(kw1, (C, C, 3, 3), jnp.float32) * 0.1   # Conv2d (OIHW)
    w2 = jax.random.normal(kw2, (C, C, 3, 3), jnp.float32) * 0.1
    g1 = 1.0 + 0.1 * jax.random.normal(kg1, (C,), jnp.float32)     # BN gamma
    b1 = 0.1 * jax.random.normal(kb1, (C,), jnp.float32)           # BN beta
    g2 = 1.0 + 0.1 * jax.random.normal(kg2, (C,), jnp.float32)
    b2 = 0.1 * jax.random.normal(kb2, (C,), jnp.float32)

    # One-time parameter packing (hoisted out of the per-call jitted forward).
    w1m, w2m, bn_packed, proj = pack_params(w1, w2, g1, b1, g2, b2, W)

    out = basic_block(x, w1m, w2m, bn_packed, proj)
    out = jax.block_until_ready(out)

    ref = _reference(x, w1, w2, g1, b1, g2, b2)
    assert out.shape == (N, C, H, W)
    err = float(jnp.max(jnp.abs(out - ref)))
    # bf16 MXU operands with f32 accumulation vs the pure-f32 reference.
    assert err < 8e-2, f"max abs err {err}"

    print("KERNEL_OK")
</pallas_src>

<mosaic_0001>
module attributes {stable_mosaic.version = 11 : i64} {
  func.func @_basic_block_kernel(%arg0: memref<32x128xf32, #tpu.memory_space<vmem>>, %arg1: memref<32x1xf32, #tpu.memory_space<vmem>>, %arg2: memref<32x1xf32, #tpu.memory_space<vmem>>, %arg3: memref<3x128x128xbf16, #tpu.memory_space<vmem>>, %arg4: memref<3x128x128xbf16, #tpu.memory_space<vmem>>, %arg5: memref<4x128xf32, #tpu.memory_space<vmem>>, %arg6: memref<128x128xf32, #tpu.memory_space<vmem>>, %arg7: memref<32x128xf32, #tpu.memory_space<vmem>>) attributes {dimension_semantics = [], scalar_prefetch = 0 : i64, scratch_operands = 0 : i64, tpu.core_type = #tpu.core_type<tc>} {
    %c0 = arith.constant 0 : index
    %c0_0 = arith.constant 0 : index
    %0 = vector.load %arg1[%c0, %c0_0] : memref<32x1xf32, #tpu.memory_space<vmem>>, vector<32x1xf32>
    %c0_1 = arith.constant 0 : index
    %c0_2 = arith.constant 0 : index
    %1 = vector.load %arg2[%c0_1, %c0_2] : memref<32x1xf32, #tpu.memory_space<vmem>>, vector<32x1xf32>
    %c0_3 = arith.constant 0 : index
    %c0_4 = arith.constant 0 : index
    %2 = vector.load %arg6[%c0_3, %c0_4] : memref<128x128xf32, #tpu.memory_space<vmem>>, vector<128x128xf32>
    %c0_5 = arith.constant 0 : index
    %c0_6 = arith.constant 0 : index
    %3 = vector.load %arg0[%c0_5, %c0_6] : memref<32x128xf32, #tpu.memory_space<vmem>>, vector<32x128xf32>
    %c1_i32 = arith.constant 1 : i32
    %4 = tpu.dynamic_rotate %3 by %c1_i32 dim 0 : vector<32x128xf32>, i32 -> vector<32x128xf32>
    %5 = vector.broadcast %0 : vector<32x1xf32> to vector<32x128xf32>
    %6 = arith.mulf %4, %5 : vector<32x128xf32>
    %c31_i32 = arith.constant 31 : i32
    %7 = tpu.dynamic_rotate %3 by %c31_i32 dim 0 : vector<32x128xf32>, i32 -> vector<32x128xf32>
    %8 = vector.broadcast %1 : vector<32x1xf32> to vector<32x128xf32>
    %9 = arith.mulf %7, %8 : vector<32x128xf32>
    %10 = arith.truncf %3 : vector<32x128xf32> to vector<32x128xbf16>
    %c1 = arith.constant 1 : index
    %c0_7 = arith.constant 0 : index
    %c0_8 = arith.constant 0 : index
    %11 = vector.load %arg3[%c1, %c0_7, %c0_8] : memref<3x128x128xbf16, #tpu.memory_space<vmem>>, vector<1x128x128xbf16>
    %12 = vector.shape_cast %11 : vector<1x128x128xbf16> to vector<128x128xbf16>
    %cst = arith.constant dense<0.000000e+00> : vector<32x128xf32>
    %13 = tpu.matmul %10, %12, %cst {dimension_numbers = #tpu.dot_dimension_numbers<[1], [0], [0], [1], [0, 0, 1, 1], [], []>} : vector<32x128xbf16>, vector<128x128xbf16>, vector<32x128xf32> -> vector<32x128xf32>
    %14 = arith.truncf %6 : vector<32x128xf32> to vector<32x128xbf16>
    %c0_9 = arith.constant 0 : index
    %c0_10 = arith.constant 0 : index
    %c0_11 = arith.constant 0 : index
    %15 = vector.load %arg3[%c0_9, %c0_10, %c0_11] : memref<3x128x128xbf16, #tpu.memory_space<vmem>>, vector<1x128x128xbf16>
    %16 = vector.shape_cast %15 : vector<1x128x128xbf16> to vector<128x128xbf16>
    %cst_12 = arith.constant dense<0.000000e+00> : vector<32x128xf32>
    %17 = tpu.matmul %14, %16, %cst_12 {dimension_numbers = #tpu.dot_dimension_numbers<[1], [0], [0], [1], [0, 0, 1, 1], [], []>} : vector<32x128xbf16>, vector<128x128xbf16>, vector<32x128xf32> -> vector<32x128xf32>
    %18 = arith.addf %13, %17 : vector<32x128xf32>
    %19 = arith.truncf %9 : vector<32x128xf32> to vector<32x128xbf16>
    %c2 = arith.constant 2 : index
    %c0_13 = arith.constant 0 : index
    %c0_14 = arith.constant 0 : index
    %20 = vector.load %arg3[%c2, %c0_13, %c0_14] : memref<3x128x128xbf16, #tpu.memory_space<vmem>>, vector<1x128x128xbf16>
    %21 = vector.shape_cast %20 : vector<1x128x128xbf16> to vector<128x128xbf16>
    %cst_15 = arith.constant dense<0.000000e+00> : vector<32x128xf32>
    %22 = tpu.matmul %19, %21, %cst_15 {dimension_numbers = #tpu.dot_dimension_numbers<[1], [0], [0], [1], [0, 0, 1, 1], [], []>} : vector<32x128xbf16>, vector<128x128xbf16>, vector<32x128xf32> -> vector<32x128xf32>
    %23 = arith.addf %18, %22 : vector<32x128xf32>
    %c0_16 = arith.constant 0 : index
    %c0_17 = arith.constant 0 : index
    %24 = vector.load %arg5[%c0_16, %c0_17] : memref<4x128xf32, #tpu.memory_space<vmem>>, vector<1x128xf32>
    %c1_18 = arith.constant 1 : index
    %c0_19 = arith.constant 0 : index
    %25 = vector.load %arg5[%c1_18, %c0_19] : memref<4x128xf32, #tpu.memory_space<vmem>>, vector<1x128xf32>
    %cst_20 = arith.constant dense<0.000000e+00> : vector<128xf32>
    %26 = vector.multi_reduction <add>, %23, %cst_20 [0] : vector<32x128xf32> to vector<128xf32>
    %27 = vector.shape_cast %26 : vector<128xf32> to vector<1x128xf32>
    %28 = arith.mulf %23, %23 : vector<32x128xf32>
    %cst_21 = arith.constant dense<0.000000e+00> : vector<128xf32>
    %29 = vector.multi_reduction <add>, %28, %cst_21 [0] : vector<32x128xf32> to vector<128xf32>
    %30 = vector.shape_cast %29 : vector<128xf32> to vector<1x128xf32>
    %31 = tpu.concatenate %27, %30 in 0 : vector<1x128xf32>, vector<1x128xf32> -> vector<2x128xf32>
    %cst_22 = arith.constant dense<0.000000e+00> : vector<2x128xf32>
    %32 = tpu.matmul %31, %2, %cst_22 {dimension_numbers = #tpu.dot_dimension_numbers<[1], [0], [0], [1], [0, 0, 1, 1], [], []>} : vector<2x128xf32>, vector<128x128xf32>, vector<2x128xf32> -> vector<2x128xf32>
    %cst_23 = arith.constant 0.001953125 : f32
    %33 = vector.broadcast %cst_23 : f32 to vector<2x128xf32>
    %34 = arith.mulf %32, %33 : vector<2x128xf32>
    %35 = vector.extract_strided_slice %34 {offsets = [0, 0], sizes = [1, 128], strides = [1, 1]} : vector<2x128xf32> to vector<1x128xf32>
    %36 = vector.extract_strided_slice %34 {offsets = [1, 0], sizes = [1, 128], strides = [1, 1]} : vector<2x128xf32> to vector<1x128xf32>
    %37 = arith.mulf %35, %35 : vector<1x128xf32>
    %38 = arith.subf %36, %37 : vector<1x128xf32>
    %cst_24 = arith.constant 9.99999974E-6 : f32
    %39 = vector.broadcast %cst_24 : f32 to vector<1x128xf32>
    %40 = arith.addf %38, %39 : vector<1x128xf32>
    %41 = math.rsqrt %40 : vector<1x128xf32>
    %42 = arith.mulf %24, %41 : vector<1x128xf32>
    %43 = arith.mulf %35, %42 : vector<1x128xf32>
    %44 = arith.subf %25, %43 : vector<1x128xf32>
    %45 = vector.broadcast %42 : vector<1x128xf32> to vector<32x128xf32>
    %46 = arith.mulf %23, %45 : vector<32x128xf32>
    %47 = vector.broadcast %44 : vector<1x128xf32> to vector<32x128xf32>
    %48 = arith.addf %46, %47 : vector<32x128xf32>
    %cst_25 = arith.constant 0.000000e+00 : f32
    %49 = vector.broadcast %cst_25 : f32 to vector<32x128xf32>
    %50 = arith.maximumf %48, %49 : vector<32x128xf32>
    %c1_i32_26 = arith.constant 1 : i32
    %51 = tpu.dynamic_rotate %50 by %c1_i32_26 dim 0 : vector<32x128xf32>, i32 -> vector<32x128xf32>
    %52 = vector.broadcast %0 : vector<32x1xf32> to vector<32x128xf32>
    %53 = arith.mulf %51, %52 : vector<32x128xf32>
    %c31_i32_27 = arith.constant 31 : i32
    %54 = tpu.dynamic_rotate %50 by %c31_i32_27 dim 0 : vector<32x128xf32>, i32 -> vector<32x128xf32>
    %55 = vector.broadcast %1 : vector<32x1xf32> to vector<32x128xf32>
    %56 = arith.mulf %54, %55 : vector<32x128xf32>
    %57 = arith.truncf %50 : vector<32x128xf32> to vector<32x128xbf16>
    %c1_28 = arith.constant 1 : index
    %c0_29 = arith.constant 0 : index
    %c0_30 = arith.constant 0 : index
    %58 = vector.load %arg4[%c1_28, %c0_29, %c0_30] : memref<3x128x128xbf16, #tpu.memory_space<vmem>>, vector<1x128x128xbf16>
    %59 = vector.shape_cast %58 : vector<1x128x128xbf16> to vector<128x128xbf16>
    %cst_31 = arith.constant dense<0.000000e+00> : vector<32x128xf32>
    %60 = tpu.matmul %57, %59, %cst_31 {dimension_numbers = #tpu.dot_dimension_numbers<[1], [0], [0], [1], [0, 0, 1, 1], [], []>} : vector<32x128xbf16>, vector<128x128xbf16>, vector<32x128xf32> -> vector<32x128xf32>
    %61 = arith.truncf %53 : vector<32x128xf32> to vector<32x128xbf16>
    %c0_32 = arith.constant 0 : index
    %c0_33 = arith.constant 0 : index
    %c0_34 = arith.constant 0 : index
    %62 = vector.load %arg4[%c0_32, %c0_33, %c0_34] : memref<3x128x128xbf16, #tpu.memory_space<vmem>>, vector<1x128x128xbf16>
    %63 = vector.shape_cast %62 : vector<1x128x128xbf16> to vector<128x128xbf16>
    %cst_35 = arith.constant dense<0.000000e+00> : vector<32x128xf32>
    %64 = tpu.matmul %61, %63, %cst_35 {dimension_numbers = #tpu.dot_dimension_numbers<[1], [0], [0], [1], [0, 0, 1, 1], [], []>} : vector<32x128xbf16>, vector<128x128xbf16>, vector<32x128xf32> -> vector<32x128xf32>
    %65 = arith.addf %60, %64 : vector<32x128xf32>
    %66 = arith.truncf %56 : vector<32x128xf32> to vector<32x128xbf16>
    %c2_36 = arith.constant 2 : index
    %c0_37 = arith.constant 0 : index
    %c0_38 = arith.constant 0 : index
    %67 = vector.load %arg4[%c2_36, %c0_37, %c0_38] : memref<3x128x128xbf16, #tpu.memory_space<vmem>>, vector<1x128x128xbf16>
    %68 = vector.shape_cast %67 : vector<1x128x128xbf16> to vector<128x128xbf16>
    %cst_39 = arith.constant dense<0.000000e+00> : vector<32x128xf32>
    %69 = tpu.matmul %66, %68, %cst_39 {dimension_numbers = #tpu.dot_dimension_numbers<[1], [0], [0], [1], [0, 0, 1, 1], [], []>} : vector<32x128xbf16>, vector<128x128xbf16>, vector<32x128xf32> -> vector<32x128xf32>
    %70 = arith.addf %65, %69 : vector<32x128xf32>
    %c2_40 = arith.constant 2 : index
    %c0_41 = arith.constant 0 : index
    %71 = vector.load %arg5[%c2_40, %c0_41] : memref<4x128xf32, #tpu.memory_space<vmem>>, vector<1x128xf32>
    %c3 = arith.constant 3 : index
    %c0_42 = arith.constant 0 : index
    %72 = vector.load %arg5[%c3, %c0_42] : memref<4x128xf32, #tpu.memory_space<vmem>>, vector<1x128xf32>
    %cst_43 = arith.constant dense<0.000000e+00> : vector<128xf32>
    %73 = vector.multi_reduction <add>, %70, %cst_43 [0] : vector<32x128xf32> to vector<128xf32>
    %74 = vector.shape_cast %73 : vector<128xf32> to vector<1x128xf32>
    %75 = arith.mulf %70, %70 : vector<32x128xf32>
    %cst_44 = arith.constant dense<0.000000e+00> : vector<128xf32>
    %76 = vector.multi_reduction <add>, %75, %cst_44 [0] : vector<32x128xf32> to vector<128xf32>
    %77 = vector.shape_cast %76 : vector<128xf32> to vector<1x128xf32>
    %78 = tpu.concatenate %74, %77 in 0 : vector<1x128xf32>, vector<1x128xf32> -> vector<2x128xf32>
    %cst_45 = arith.constant dense<0.000000e+00> : vector<2x128xf32>
    %79 = tpu.matmul %78, %2, %cst_45 {dimension_numbers = #tpu.dot_dimension_numbers<[1], [0], [0], [1], [0, 0, 1, 1], [], []>} : vector<2x128xf32>, vector<128x128xf32>, vector<2x128xf32> -> vector<2x128xf32>
    %cst_46 = arith.constant 0.001953125 : f32
    %80 = vector.broadcast %cst_46 : f32 to vector<2x128xf32>
    %81 = arith.mulf %79, %80 : vector<2x128xf32>
    %82 = vector.extract_strided_slice %81 {offsets = [0, 0], sizes = [1, 128], strides = [1, 1]} : vector<2x128xf32> to vector<1x128xf32>
    %83 = vector.extract_strided_slice %81 {offsets = [1, 0], sizes = [1, 128], strides = [1, 1]} : vector<2x128xf32> to vector<1x128xf32>
    %84 = arith.mulf %82, %82 : vector<1x128xf32>
    %85 = arith.subf %83, %84 : vector<1x128xf32>
    %cst_47 = arith.constant 9.99999974E-6 : f32
    %86 = vector.broadcast %cst_47 : f32 to vector<1x128xf32>
    %87 = arith.addf %85, %86 : vector<1x128xf32>
    %88 = math.rsqrt %87 : vector<1x128xf32>
    %89 = arith.mulf %71, %88 : vector<1x128xf32>
    %90 = arith.mulf %82, %89 : vector<1x128xf32>
    %91 = arith.subf %72, %90 : vector<1x128xf32>
    %92 = vector.broadcast %89 : vector<1x128xf32> to vector<32x128xf32>
    %93 = arith.mulf %70, %92 : vector<32x128xf32>
    %94 = vector.broadcast %91 : vector<1x128xf32> to vector<32x128xf32>
    %95 = arith.addf %93, %94 : vector<32x128xf32>
    %96 = arith.addf %3, %95 : vector<32x128xf32>
    %c0_48 = arith.constant 0 : index
    %c0_49 = arith.constant 0 : index
    %97 = vector.load %arg7[%c0_48, %c0_49] : memref<32x128xf32, #tpu.memory_space<vmem>>, vector<32x128xf32>
    tpu.vector_store %arg7[%c0_48, %c0_49], %96 {strides = array<i32>} : memref<32x128xf32, #tpu.memory_space<vmem>>, vector<32x128xf32>,
    return
  }
}

</mosaic_0001>

<llo_original>
// kernel: basic_block.1
$region0: #{basic_block.1}
  #allocation0 [shape = 'u32[]', space=smem, size = 0x4, offset = 0x4, fixed_abs, tag = 'smem constant byte address 0x4 - core index']
  #allocation1 [shape = 'u32[72,128]{1,0:T(1,128)}', space=vmem, size = 0x9000, scoped, tag = 'internal scratch']
  %s0 = inlined_call_operand.vmem [shape: f32[32,128], index: 0, kind: input, shape index: {}]
  %s1 = inlined_call_operand.vmem [shape: f32[32,1], index: 1, kind: input, shape index: {}]
  %s2 = inlined_call_operand.vmem [shape: f32[32,1], index: 2, kind: input, shape index: {}]
  %s3 = inlined_call_operand.vmem [shape: bf16[3,128,128], index: 3, kind: input, shape index: {}]
  %s4 = inlined_call_operand.vmem [shape: bf16[3,128,128], index: 4, kind: input, shape index: {}]
  %s5 = inlined_call_operand.vmem [shape: f32[4,128], index: 5, kind: input, shape index: {}]
  %s6 = inlined_call_operand.vmem [shape: f32[128,128], index: 6, kind: input, shape index: {}]
  %s7 = inlined_call_operand.vmem [shape: f32[32,128], index: 7, kind: output, shape index: {}]
  %s8 = sld [smem:[#allocation0]]
  $region38: #{basic_block.1} parent=0
    _
  %s10 = ssub.s32 1, %s8
  %s11 = scalar_select 0, %s10, %s8
  // Predicated region
  $region2: #{basic_block.1} parent=0 // pred_check
    _
  $region3: #{basic_block.1} parent=0 // pred_check_branch
    %13 = sbr.rel (0) target = $region5
  $region4: #{basic_block.1} parent=0 // pred_region
    _
  $region5: #{basic_block.1} parent=0 // pred_fallthru
    _
  // Predicated region
  $region6: #{basic_block.1} parent=0 // pred_check
    _
  $region7: #{basic_block.1} parent=0 // pred_check_branch
    %15 = sbr.rel (0) target = $region9
  $region8: #{basic_block.1} parent=0 // pred_region
    _
  $region9: #{basic_block.1} parent=0 // pred_fallthru
    _
  // Predicated region
  $region10: #{basic_block.1} parent=0 // pred_check
    _
  $region11: #{basic_block.1} parent=0 // pred_check_branch
    %17 = sbr.rel (0) target = $region13
  $region12: #{basic_block.1} parent=0 // pred_region
    _
  $region13: #{basic_block.1} parent=0 // pred_fallthru
    _
  // Predicated region
  $region14: #{basic_block.1} parent=0 // pred_check
    _
  $region15: #{basic_block.1} parent=0 // pred_check_branch
    %19 = sbr.rel (0) target = $region17
  $region16: #{basic_block.1} parent=0 // pred_region
    _
  $region17: #{basic_block.1} parent=0 // pred_fallthru
    _
  // Predicated region
  $region18: #{basic_block.1} parent=0 // pred_check
    _
  $region19: #{basic_block.1} parent=0 // pred_check_branch
    %21 = sbr.rel (0) target = $region21
  $region20: #{basic_block.1} parent=0 // pred_region
    _
  $region21: #{basic_block.1} parent=0 // pred_fallthru
    _
  // Predicated region
  $region22: #{basic_block.1} parent=0 // pred_check
    _
  $region23: #{basic_block.1} parent=0 // pred_check_branch
    %23 = sbr.rel (0) target = $region25
  $region24: #{basic_block.1} parent=0 // pred_region
    _
  $region25: #{basic_block.1} parent=0 // pred_fallthru
    _
  // Predicated region
  $region26: #{basic_block.1} parent=0 // pred_check
    _
  $region27: #{basic_block.1} parent=0 // pred_check_branch
    %25 = sbr.rel (0) target = $region29
  $region28: #{basic_block.1} parent=0 // pred_region
    _
  $region29: #{basic_block.1} parent=0 // pred_fallthru
    _
  %v26 = vld [vmem:[%s1] sm:$0xff]
  %v27 = vld [vmem:[%s1 + $0x8] sm:$0xff]
  %v28 = vld [vmem:[%s1 + $0x10] sm:$0xff]
  %v29 = vld [vmem:[%s1 + $0x18] sm:$0xff]
  %v30 = vld [vmem:[%s2] sm:$0xff]
  %v31 = vld [vmem:[%s2 + $0x8] sm:$0xff]
  %v32 = vld [vmem:[%s2 + $0x10] sm:$0xff]
  %v33 = vld [vmem:[%s2 + $0x18] sm:$0xff]
  %v34 = vld [vmem:[%s6] sm:$0xff]
  %v35 = vld [vmem:[%s6 + $0x8] sm:$0xff]
  %v36 = vld [vmem:[%s6 + $0x10] sm:$0xff]
  %v37 = vld [vmem:[%s6 + $0x18] sm:$0xff]
  %v38 = vld [vmem:[%s6 + $0x20] sm:$0xff]
  %v39 = vld [vmem:[%s6 + $0x28] sm:$0xff]
  %v40 = vld [vmem:[%s6 + $0x30] sm:$0xff]
  %v41 = vld [vmem:[%s6 + $0x38] sm:$0xff]
  %v42 = vld [vmem:[%s6 + $0x40] sm:$0xff]
  %v43 = vld [vmem:[%s6 + $0x48] sm:$0xff]
  %v44 = vld [vmem:[%s6 + $0x50] sm:$0xff]
  %v45 = vld [vmem:[%s6 + $0x58] sm:$0xff]
  %v46 = vld [vmem:[%s6 + $0x60] sm:$0xff]
  %v47 = vld [vmem:[%s6 + $0x68] sm:$0xff]
  %v48 = vld [vmem:[%s6 + $0x70] sm:$0xff]
  %v49 = vld [vmem:[%s6 + $0x78] sm:$0xff]
  %v50 = vld [vmem:[%s0] sm:$0xff]
  %v51 = vld [vmem:[%s0 + $0x8] sm:$0xff]
  %v52 = vld [vmem:[%s0 + $0x10] sm:$0xff]
  %v53 = vld [vmem:[%s0 + $0x18] sm:$0xff]
  %v54 = vrot.slane %v50, 7
  %v55 = vrot.slane %v51, 7
  %v56 = vrot.slane %v52, 7
  %v57 = vrot.slane %v53, 7
  %v58 = vlaneseq
  %v59 = vshrl.u32 %v58, 7
  %vm60 = vcmp.lt.s32.totalorder %v59, 1
  %v61 = vsel %vm60, %v56, %v57
  %v62 = vsel %vm60, %v55, %v56
  %v63 = vsel %vm60, %v54, %v55
  %v64 = vsel %vm60, %v57, %v54
  %66 = vset.pattern.permute.xlu0 0
  %67 = vperm.xlu0 %66, %v26
  %v68 = vpop.permute.xlu0 %67
  %71 = vset.pattern.permute.xlu0 0
  %72 = vperm.xlu0 %71, %v27
  %v73 = vpop.permute.xlu0 %72
  %76 = vset.pattern.permute.xlu0 0
  %77 = vperm.xlu0 %76, %v28
  %v78 = vpop.permute.xlu0 %77
  %81 = vset.pattern.permute.xlu0 0
  %82 = vperm.xlu0 %81, %v29
  %v83 = vpop.permute.xlu0 %82
  %v85 = vmul.f32 %v64, %v68
  %v86 = vmul.f32 %v63, %v73
  %v87 = vmul.f32 %v62, %v78
  %v88 = vmul.f32 %v61, %v83
  %v89 = vrot.slane %v50, 1
  %v90 = vrot.slane %v51, 1
  %v91 = vrot.slane %v52, 1
  %v92 = vrot.slane %v53, 1
  %vm93 = vcmp.lt.s32.totalorder %v59, 7
  %v94 = vsel %vm93, %v91, %v92
  %v95 = vsel %vm93, %v90, %v91
  %v96 = vsel %vm93, %v89, %v90
  %v97 = vsel %vm93, %v92, %v89
  %99 = vset.pattern.permute.xlu0 0
  %100 = vperm.xlu0 %99, %v30
  %v101 = vpop.permute.xlu0 %100
  %104 = vset.pattern.permute.xlu0 0
  %105 = vperm.xlu0 %104, %v31
  %v106 = vpop.permute.xlu0 %105
  %109 = vset.pattern.permute.xlu0 0
  %110 = vperm.xlu0 %109, %v32
  %v111 = vpop.permute.xlu0 %110
  %114 = vset.pattern.permute.xlu0 0
  %115 = vperm.xlu0 %114, %v33
  %v116 = vpop.permute.xlu0 %115
  %v118 = vmul.f32 %v96, %v101
  %v119 = vmul.f32 %v95, %v106
  %v120 = vmul.f32 %v94, %v111
  %v121 = vmul.f32 %v97, %v116
  %v122 = vpack.c.bf16 %v51, %v50
  %v123 = vpack.c.bf16 %v53, %v52
  %s124 = scalar_lea.vmem %s3, 64
  %v125 = vld [vmem:[%s124] sm:$0xf]
  %v126 = vld [vmem:[%s124 + $0x4] sm:$0xf]
  %v127 = vld [vmem:[%s124 + $0x8] sm:$0xf]
  %v128 = vld [vmem:[%s124 + $0xc] sm:$0xf]
  %v129 = vld [vmem:[%s124 + $0x10] sm:$0xf]
  %v130 = vld [vmem:[%s124 + $0x14] sm:$0xf]
  %v131 = vld [vmem:[%s124 + $0x18] sm:$0xf]
  %v132 = vld [vmem:[%s124 + $0x1c] sm:$0xf]
  %v133 = vld [vmem:[%s124 + $0x20] sm:$0xf]
  %v134 = vld [vmem:[%s124 + $0x24] sm:$0xf]
  %v135 = vld [vmem:[%s124 + $0x28] sm:$0xf]
  %v136 = vld [vmem:[%s124 + $0x2c] sm:$0xf]
  %v137 = vld [vmem:[%s124 + $0x30] sm:$0xf]
  %v138 = vld [vmem:[%s124 + $0x34] sm:$0xf]
  %v139 = vld [vmem:[%s124 + $0x38] sm:$0xf]
  %v140 = vld [vmem:[%s124 + $0x3c] sm:$0xf]
  %v141 = vpack.c.bf16 %v86, %v85
  %v142 = vpack.c.bf16 %v88, %v87
  %v143 = vld [vmem:[%s3] sm:$0xf]
  %v144 = vld [vmem:[%s3 + $0x4] sm:$0xf]
  %v145 = vld [vmem:[%s3 + $0x8] sm:$0xf]
  %v146 = vld [vmem:[%s3 + $0xc] sm:$0xf]
  %v147 = vld [vmem:[%s3 + $0x10] sm:$0xf]
  %v148 = vld [vmem:[%s3 + $0x14] sm:$0xf]
  %v149 = vld [vmem:[%s3 + $0x18] sm:$0xf]
  %v150 = vld [vmem:[%s3 + $0x1c] sm:$0xf]
  %v151 = vld [vmem:[%s3 + $0x20] sm:$0xf]
  %v152 = vld [vmem:[%s3 + $0x24] sm:$0xf]
  %v153 = vld [vmem:[%s3 + $0x28] sm:$0xf]
  %v154 = vld [vmem:[%s3 + $0x2c] sm:$0xf]
  %v155 = vld [vmem:[%s3 + $0x30] sm:$0xf]
  %v156 = vld [vmem:[%s3 + $0x34] sm:$0xf]
  %v157 = vld [vmem:[%s3 + $0x38] sm:$0xf]
  %v158 = vld [vmem:[%s3 + $0x3c] sm:$0xf]
  %v175 = vunpack.c.l.b16 %v143
  %v176 = vunpack.c.l.b16 %v144
  %v177 = vunpack.c.l.b16 %v145
  %v178 = vunpack.c.l.b16 %v146
  %v179 = vunpack.c.l.b16 %v147
  %v180 = vunpack.c.l.b16 %v148
  %v181 = vunpack.c.l.b16 %v149
  %v182 = vunpack.c.l.b16 %v150
  %v183 = vunpack.c.l.b16 %v151
  %v184 = vunpack.c.l.b16 %v152
  %v185 = vunpack.c.l.b16 %v153
  %v186 = vunpack.c.l.b16 %v154
  %v187 = vunpack.c.l.b16 %v155
  %v188 = vunpack.c.l.b16 %v156
  %v189 = vunpack.c.l.b16 %v157
  %v190 = vunpack.c.l.b16 %v158
  %v191 = vpack.c.b16 %v176, %v175
  %v192 = vpack.c.b16 %v178, %v177
  %v193 = vpack.c.b16 %v180, %v179
  %v194 = vpack.c.b16 %v182, %v181
  %v195 = vpack.c.b16 %v184, %v183
  %v196 = vpack.c.b16 %v186, %v185
  %v197 = vpack.c.b16 %v188, %v187
  %v198 = vpack.c.b16 %v190, %v189
  %207 = vmatpush.bf16.msra.mxu0 %v198
  %208 = vmatpush.bf16.msra.mxu0 %v197
  %209 = vmatpush.bf16.msra.mxu0 %v196
  %210 = vmatpush.bf16.msra.mxu0 %v195
  %211 = vmatpush.bf16.msra.mxu0 %v194
  %212 = vmatpush.bf16.msra.mxu0 %v193
  %213 = vmatpush.bf16.msra.mxu0 %v192
  %214 = vmatpush.bf16.msra.mxu0 %v191
  %215 = vmatmul.bf16.gmra.mxu0 %v141
  %v216 = vpop.f32.mrf.mxu0
  %v217 = vadd.f32 0.0, %v216
  %v218 = vpop.f32.mrf.mxu0
  %v219 = vadd.f32 0.0, %v218
  %220 = vmatmul.bf16.gmra.mxu0 %v142
  %v221 = vpop.f32.mrf.mxu0
  %v222 = vadd.f32 0.0, %v221
  %v223 = vpop.f32.mrf.mxu0
  %v224 = vadd.f32 0.0, %v223
  %225 = vdwg.mxu0
  %v242 = vunpack.c.l.b16 %v125
  %v243 = vunpack.c.l.b16 %v126
  %v244 = vunpack.c.l.b16 %v127
  %v245 = vunpack.c.l.b16 %v128
  %v246 = vunpack.c.l.b16 %v129
  %v247 = vunpack.c.l.b16 %v130
  %v248 = vunpack.c.l.b16 %v131
  %v249 = vunpack.c.l.b16 %v132
  %v250 = vunpack.c.l.b16 %v133
  %v251 = vunpack.c.l.b16 %v134
  %v252 = vunpack.c.l.b16 %v135
  %v253 = vunpack.c.l.b16 %v136
  %v254 = vunpack.c.l.b16 %v137
  %v255 = vunpack.c.l.b16 %v138
  %v256 = vunpack.c.l.b16 %v139
  %v257 = vunpack.c.l.b16 %v140
  %v258 = vpack.c.b16 %v243, %v242
  %v259 = vpack.c.b16 %v245, %v244
  %v260 = vpack.c.b16 %v247, %v246
  %v261 = vpack.c.b16 %v249, %v248
  %v262 = vpack.c.b16 %v251, %v250
  %v263 = vpack.c.b16 %v253, %v252
  %v264 = vpack.c.b16 %v255, %v254
  %v265 = vpack.c.b16 %v257, %v256
  %274 = vmatpush.bf16.msra.mxu0 %v265
  %275 = vmatpush.bf16.msra.mxu0 %v264
  %276 = vmatpush.bf16.msra.mxu0 %v263
  %277 = vmatpush.bf16.msra.mxu0 %v262
  %278 = vmatpush.bf16.msra.mxu0 %v261
  %279 = vmatpush.bf16.msra.mxu0 %v260
  %280 = vmatpush.bf16.msra.mxu0 %v259
  %281 = vmatpush.bf16.msra.mxu0 %v258
  %282 = vmatmul.bf16.gmra.mxu0 %v122
  %v283 = vpop.f32.mrf.mxu0
  %v284 = vadd.f32 %v217, %v283
  %v285 = vpop.f32.mrf.mxu0
  %v286 = vadd.f32 %v219, %v285
  %287 = vmatmul.bf16.gmra.mxu0 %v123
  %v288 = vpop.f32.mrf.mxu0
  %v289 = vadd.f32 %v222, %v288
  %v290 = vpop.f32.mrf.mxu0
  %v291 = vadd.f32 %v224, %v290
  %292 = vdwg.mxu0
  %v293 = vpack.c.bf16 %v119, %v118
  %v294 = vpack.c.bf16 %v121, %v120
  %s295 = scalar_lea.vmem %s3, 128
  %v296 = vld [vmem:[%s295] sm:$0xf]
  %v297 = vld [vmem:[%s295 + $0x4] sm:$0xf]
  %v298 = vld [vmem:[%s295 + $0x8] sm:$0xf]
  %v299 = vld [vmem:[%s295 + $0xc] sm:$0xf]
  %v300 = vld [vmem:[%s295 + $0x10] sm:$0xf]
  %v301 = vld [vmem:[%s295 + $0x14] sm:$0xf]
  %v302 = vld [vmem:[%s295 + $0x18] sm:$0xf]
  %v303 = vld [vmem:[%s295 + $0x1c] sm:$0xf]
  %v304 = vld [vmem:[%s295 + $0x20] sm:$0xf]
  %v305 = vld [vmem:[%s295 + $0x24] sm:$0xf]
  %v306 = vld [vmem:[%s295 + $0x28] sm:$0xf]
  %v307 = vld [vmem:[%s295 + $0x2c] sm:$0xf]
  %v308 = vld [vmem:[%s295 + $0x30] sm:$0xf]
  %v309 = vld [vmem:[%s295 + $0x34] sm:$0xf]
  %v310 = vld [vmem:[%s295 + $0x38] sm:$0xf]
  %v311 = vld [vmem:[%s295 + $0x3c] sm:$0xf]
  %v328 = vunpack.c.l.b16 %v296
  %v329 = vunpack.c.l.b16 %v297
  %v330 = vunpack.c.l.b16 %v298
  %v331 = vunpack.c.l.b16 %v299
  %v332 = vunpack.c.l.b16 %v300
  %v333 = vunpack.c.l.b16 %v301
  %v334 = vunpack.c.l.b16 %v302
  %v335 = vunpack.c.l.b16 %v303
  %v336 = vunpack.c.l.b16 %v304
  %v337 = vunpack.c.l.b16 %v305
  %v338 = vunpack.c.l.b16 %v306
  %v339 = vunpack.c.l.b16 %v307
  %v340 = vunpack.c.l.b16 %v308
  %v341 = vunpack.c.l.b16 %v309
  %v342 = vunpack.c.l.b16 %v310
  %v343 = vunpack.c.l.b16 %v311
  %v344 = vpack.c.b16 %v329, %v328
  %v345 = vpack.c.b16 %v331, %v330
  %v346 = vpack.c.b16 %v333, %v332
  %v347 = vpack.c.b16 %v335, %v334
  %v348 = vpack.c.b16 %v337, %v336
  %v349 = vpack.c.b16 %v339, %v338
  %v350 = vpack.c.b16 %v341, %v340
  %v351 = vpack.c.b16 %v343, %v342
  %360 = vmatpush.bf16.msra.mxu0 %v351
  %361 = vmatpush.bf16.msra.mxu0 %v350
  %362 = vmatpush.bf16.msra.mxu0 %v349
  %363 = vmatpush.bf16.msra.mxu0 %v348
  %364 = vmatpush.bf16.msra.mxu0 %v347
  %365 = vmatpush.bf16.msra.mxu0 %v346
  %366 = vmatpush.bf16.msra.mxu0 %v345
  %367 = vmatpush.bf16.msra.mxu0 %v344
  %368 = vmatmul.bf16.gmra.mxu0 %v293
  %v369 = vpop.f32.mrf.mxu0
  %v370 = vadd.f32 0.0, %v369
  %v371 = vpop.f32.mrf.mxu0
  %v372 = vadd.f32 0.0, %v371
  %373 = vmatmul.bf16.gmra.mxu0 %v294
  %v374 = vpop.f32.mrf.mxu0
  %v375 = vadd.f32 0.0, %v374
  %v376 = vpop.f32.mrf.mxu0
  %v377 = vadd.f32 0.0, %v376
  %378 = vdwg.mxu0
  %v379 = vadd.f32 %v284, %v370
  %v380 = vadd.f32 %v286, %v372
  %v381 = vadd.f32 %v289, %v375
  %v382 = vadd.f32 %v291, %v377
  %v383 = vld [vmem:[%s5] sm:$0x1]
  %v384 = vld [vmem:[%s5 + $0x1] sm:$0x1]
  %v385 = vadd.f32 %v379, %v380
  %v386 = vadd.f32 %v385, %v381
  %v387 = vadd.f32 %v386, %v382
  %v388 = vrot.slane %v387, 4
  %v389 = vadd.f32 %v387, %v388
  %v390 = vrot.slane %v389, 2
  %v391 = vadd.f32 %v389, %v390
  %v392 = vrot.slane %v391, 1
  %v393 = vadd.f32 %v391, %v392
  %v394 = vmul.f32 %v379, %v379
  %v395 = vmul.f32 %v380, %v380
  %v396 = vmul.f32 %v381, %v381
  %v397 = vmul.f32 %v382, %v382
  %v398 = vadd.f32 %v394, %v395
  %v399 = vadd.f32 %v398, %v396
  %v400 = vadd.f32 %v399, %v397
  %v401 = vrot.slane %v400, 4
  %v402 = vadd.f32 %v400, %v401
  %v403 = vrot.slane %v402, 2
  %v404 = vadd.f32 %v402, %v403
  %v405 = vrot.slane %v404, 1
  %v406 = vadd.f32 %v404, %v405
  %vm407 = vcmask 1040384
  %v408 = vsel %vm407, %v393, %v406
  %409 = vmatpush.msra.mxu0 %v49
  %410 = vmatpush.msra.mxu0 %v48
  %411 = vmatpush.msra.mxu0 %v47
  %412 = vmatpush.msra.mxu0 %v46
  %413 = vmatpush.msra.mxu0 %v45
  %414 = vmatpush.msra.mxu0 %v44
  %415 = vmatpush.msra.mxu0 %v43
  %416 = vmatpush.msra.mxu0 %v42
  %417 = vmatpush.msra.mxu0 %v41
  %418 = vmatpush.msra.mxu0 %v40
  %419 = vmatpush.msra.mxu0 %v39
  %420 = vmatpush.msra.mxu0 %v38
  %421 = vmatpush.msra.mxu0 %v37
  %422 = vmatpush.msra.mxu0 %v36
  %423 = vmatpush.msra.mxu0 %v35
  %424 = vmatpush.msra.mxu0 %v34
  %425 = vmatmul.f32.gmra.mxu0 %v408
  %v426 = vpop.f32.mrf.mxu0
  %v427 = vadd.f32 0.0, %v426
  %428 = vdwg.mxu0
  %v429 = vmul.f32 %v427, 0.001953125
  %v430 = vmul.f32 %v429, %v429
  %v432 = vrot.slane %v430, 7
  %v434 = vsub.f32 %v429, %v432
  %v435 = vadd.f32 %v434, 1e-05
  %v436 = vrsqrt.pop %v435
  %v437 = vmul.f32 %v436, %v435
  %v438 = vmul.f32 %v437, %v436
  %v439 = vmul.f32 0.5, %v438
  %v440 = vsub.f32 1.5, %v439
  %v441 = vmul.f32 %v436, %v440
  %vm442 = vweird.f32 %v435
  %vm443 = vweird.f32 %v436
  %vm444 = vmor %vm442, %vm443
  %v445 = vsel %vm444, %v436, %v441
  %v447 = vrot.slane %v445, 1
  %v449 = vmul.f32 %v383, %v447
  %v450 = vmul.f32 %v429, %v449
  %v451 = vsub.f32 %v384, %v450
  %v452 = vperm.slane %v449, 0
  %v453 = vmul.f32 %v379, %v452
  %v454 = vmul.f32 %v380, %v452
  %v455 = vmul.f32 %v381, %v452
  %v456 = vmul.f32 %v382, %v452
  %v457 = vperm.slane %v451, 0
  %v458 = vadd.f32 %v453, %v457
  %v459 = vadd.f32 %v454, %v457
  %v460 = vadd.f32 %v455, %v457
  %v461 = vadd.f32 %v456, %v457
  %v462 = vmax.f32 %v458, 0.0
  %v463 = vmax.f32 %v459, 0.0
  %v464 = vmax.f32 %v460, 0.0
  %v465 = vmax.f32 %v461, 0.0
  %v466 = vrot.slane %v462, 7
  %v467 = vrot.slane %v463, 7
  %v468 = vrot.slane %v464, 7
  %v469 = vrot.slane %v465, 7
  %v470 = vsel %vm60, %v468, %v469
  %v471 = vsel %vm60, %v467, %v468
  %v472 = vsel %vm60, %v466, %v467
  %v473 = vsel %vm60, %v469, %v466
  %v474 = vmul.f32 %v473, %v68
  %v475 = vmul.f32 %v472, %v73
  %v476 = vmul.f32 %v471, %v78
  %v477 = vmul.f32 %v470, %v83
  %v478 = vrot.slane %v462, 1
  %v479 = vrot.slane %v463, 1
  %v480 = vrot.slane %v464, 1
  %v481 = vrot.slane %v465, 1
  %v482 = vsel %vm93, %v480, %v481
  %v483 = vsel %vm93, %v479, %v480
  %v484 = vsel %vm93, %v478, %v479
  %v485 = vsel %vm93, %v481, %v478
  %v486 = vmul.f32 %v484, %v101
  %v487 = vmul.f32 %v483, %v106
  %v488 = vmul.f32 %v482, %v111
  %v489 = vmul.f32 %v485, %v116
  %v490 = vpack.c.bf16 %v463, %v462
  %v491 = vpack.c.bf16 %v465, %v464
  %s492 = scalar_lea.vmem %s4, 64
  %v493 = vld [vmem:[%s492] sm:$0xf]
  %v494 = vld [vmem:[%s492 + $0x4] sm:$0xf]
  %v495 = vld [vmem:[%s492 + $0x8] sm:$0xf]
  %v496 = vld [vmem:[%s492 + $0xc] sm:$0xf]
  %v497 = vld [vmem:[%s492 + $0x10] sm:$0xf]
  %v498 = vld [vmem:[%s492 + $0x14] sm:$0xf]
  %v499 = vld [vmem:[%s492 + $0x18] sm:$0xf]
  %v500 = vld [vmem:[%s492 + $0x1c] sm:$0xf]
  %v501 = vld [vmem:[%s492 + $0x20] sm:$0xf]
  %v502 = vld [vmem:[%s492 + $0x24] sm:$0xf]
  %v503 = vld [vmem:[%s492 + $0x28] sm:$0xf]
  %v504 = vld [vmem:[%s492 + $0x2c] sm:$0xf]
  %v505 = vld [vmem:[%s492 + $0x30] sm:$0xf]
  %v506 = vld [vmem:[%s492 + $0x34] sm:$0xf]
  %v507 = vld [vmem:[%s492 + $0x38] sm:$0xf]
  %v508 = vld [vmem:[%s492 + $0x3c] sm:$0xf]
  %v509 = vpack.c.bf16 %v475, %v474
  %v510 = vpack.c.bf16 %v477, %v476
  %v511 = vld [vmem:[%s4] sm:$0xf]
  %v512 = vld [vmem:[%s4 + $0x4] sm:$0xf]
  %v513 = vld [vmem:[%s4 + $0x8] sm:$0xf]
  %v514 = vld [vmem:[%s4 + $0xc] sm:$0xf]
  %v515 = vld [vmem:[%s4 + $0x10] sm:$0xf]
  %v516 = vld [vmem:[%s4 + $0x14] sm:$0xf]
  %v517 = vld [vmem:[%s4 + $0x18] sm:$0xf]
  %v518 = vld [vmem:[%s4 + $0x1c] sm:$0xf]
  %v519 = vld [vmem:[%s4 + $0x20] sm:$0xf]
  %v520 = vld [vmem:[%s4 + $0x24] sm:$0xf]
  %v521 = vld [vmem:[%s4 + $0x28] sm:$0xf]
  %v522 = vld [vmem:[%s4 + $0x2c] sm:$0xf]
  %v523 = vld [vmem:[%s4 + $0x30] sm:$0xf]
  %v524 = vld [vmem:[%s4 + $0x34] sm:$0xf]
  %v525 = vld [vmem:[%s4 + $0x38] sm:$0xf]
  %v526 = vld [vmem:[%s4 + $0x3c] sm:$0xf]
  %v543 = vunpack.c.l.b16 %v511
  %v544 = vunpack.c.l.b16 %v512
  %v545 = vunpack.c.l.b16 %v513
  %v546 = vunpack.c.l.b16 %v514
  %v547 = vunpack.c.l.b16 %v515
  %v548 = vunpack.c.l.b16 %v516
  %v549 = vunpack.c.l.b16 %v517
  %v550 = vunpack.c.l.b16 %v518
  %v551 = vunpack.c.l.b16 %v519
  %v552 = vunpack.c.l.b16 %v520
  %v553 = vunpack.c.l.b16 %v521
  %v554 = vunpack.c.l.b16 %v522
  %v555 = vunpack.c.l.b16 %v523
  %v556 = vunpack.c.l.b16 %v524
  %v557 = vunpack.c.l.b16 %v525
  %v558 = vunpack.c.l.b16 %v526
  %v559 = vpack.c.b16 %v544, %v543
  %v560 = vpack.c.b16 %v546, %v545
  %v561 = vpack.c.b16 %v548, %v547
  %v562 = vpack.c.b16 %v550, %v549
  %v563 = vpack.c.b16 %v552, %v551
  %v564 = vpack.c.b16 %v554, %v553
  %v565 = vpack.c.b16 %v556, %v555
  %v566 = vpack.c.b16 %v558, %v557
  %575 = vmatpush.bf16.msra.mxu0 %v566
  %576 = vmatpush.bf16.msra.mxu0 %v565
  %577 = vmatpush.bf16.msra.mxu0 %v564
  %578 = vmatpush.bf16.msra.mxu0 %v563
  %579 = vmatpush.bf16.msra.mxu0 %v562
  %580 = vmatpush.bf16.msra.mxu0 %v561
  %581 = vmatpush.bf16.msra.mxu0 %v560
  %582 = vmatpush.bf16.msra.mxu0 %v559
  %583 = vmatmul.bf16.gmra.mxu0 %v509
  %v584 = vpop.f32.mrf.mxu0
  %v585 = vadd.f32 0.0, %v584
  %v586 = vpop.f32.mrf.mxu0
  %v587 = vadd.f32 0.0, %v586
  %588 = vmatmul.bf16.gmra.mxu0 %v510
  %v589 = vpop.f32.mrf.mxu0
  %v590 = vadd.f32 0.0, %v589
  %v591 = vpop.f32.mrf.mxu0
  %v592 = vadd.f32 0.0, %v591
  %593 = vdwg.mxu0
  %v610 = vunpack.c.l.b16 %v493
  %v611 = vunpack.c.l.b16 %v494
  %v612 = vunpack.c.l.b16 %v495
  %v613 = vunpack.c.l.b16 %v496
  %v614 = vunpack.c.l.b16 %v497
  %v615 = vunpack.c.l.b16 %v498
  %v616 = vunpack.c.l.b16 %v499
  %v617 = vunpack.c.l.b16 %v500
  %v618 = vunpack.c.l.b16 %v501
  %v619 = vunpack.c.l.b16 %v502
  %v620 = vunpack.c.l.b16 %v503
  %v621 = vunpack.c.l.b16 %v504
  %v622 = vunpack.c.l.b16 %v505
  %v623 = vunpack.c.l.b16 %v506
  %v624 = vunpack.c.l.b16 %v507
  %v625 = vunpack.c.l.b16 %v508
  %v626 = vpack.c.b16 %v611, %v610
  %v627 = vpack.c.b16 %v613, %v612
  %v628 = vpack.c.b16 %v615, %v614
  %v629 = vpack.c.b16 %v617, %v616
  %v630 = vpack.c.b16 %v619, %v618
  %v631 = vpack.c.b16 %v621, %v620
  %v632 = vpack.c.b16 %v623, %v622
  %v633 = vpack.c.b16 %v625, %v624
  %642 = vmatpush.bf16.msra.mxu0 %v633
  %643 = vmatpush.bf16.msra.mxu0 %v632
  %644 = vmatpush.bf16.msra.mxu0 %v631
  %645 = vmatpush.bf16.msra.mxu0 %v630
  %646 = vmatpush.bf16.msra.mxu0 %v629
  %647 = vmatpush.bf16.msra.mxu0 %v628
  %648 = vmatpush.bf16.msra.mxu0 %v627
  %649 = vmatpush.bf16.msra.mxu0 %v626
  %650 = vmatmul.bf16.gmra.mxu0 %v490
  %v651 = vpop.f32.mrf.mxu0
  %v652 = vadd.f32 %v585, %v651
  %v653 = vpop.f32.mrf.mxu0
  %v654 = vadd.f32 %v587, %v653
  %655 = vmatmul.bf16.gmra.mxu0 %v491
  %v656 = vpop.f32.mrf.mxu0
  %v657 = vadd.f32 %v590, %v656
  %v658 = vpop.f32.mrf.mxu0
  %v659 = vadd.f32 %v592, %v658
  %660 = vdwg.mxu0
  %v661 = vpack.c.bf16 %v487, %v486
  %v662 = vpack.c.bf16 %v489, %v488
  %s663 = scalar_lea.vmem %s4, 128
  %v664 = vld [vmem:[%s663] sm:$0xf]
  %v665 = vld [vmem:[%s663 + $0x4] sm:$0xf]
  %v666 = vld [vmem:[%s663 + $0x8] sm:$0xf]
  %v667 = vld [vmem:[%s663 + $0xc] sm:$0xf]
  %v668 = vld [vmem:[%s663 + $0x10] sm:$0xf]
  %v669 = vld [vmem:[%s663 + $0x14] sm:$0xf]
  %v670 = vld [vmem:[%s663 + $0x18] sm:$0xf]
  %v671 = vld [vmem:[%s663 + $0x1c] sm:$0xf]
  %v672 = vld [vmem:[%s663 + $0x20] sm:$0xf]
  %v673 = vld [vmem:[%s663 + $0x24] sm:$0xf]
  %v674 = vld [vmem:[%s663 + $0x28] sm:$0xf]
  %v675 = vld [vmem:[%s663 + $0x2c] sm:$0xf]
  %v676 = vld [vmem:[%s663 + $0x30] sm:$0xf]
  %v677 = vld [vmem:[%s663 + $0x34] sm:$0xf]
  %v678 = vld [vmem:[%s663 + $0x38] sm:$0xf]
  %v679 = vld [vmem:[%s663 + $0x3c] sm:$0xf]
  %v696 = vunpack.c.l.b16 %v664
  %v697 = vunpack.c.l.b16 %v665
  %v698 = vunpack.c.l.b16 %v666
  %v699 = vunpack.c.l.b16 %v667
  %v700 = vunpack.c.l.b16 %v668
  %v701 = vunpack.c.l.b16 %v669
  %v702 = vunpack.c.l.b16 %v670
  %v703 = vunpack.c.l.b16 %v671
  %v704 = vunpack.c.l.b16 %v672
  %v705 = vunpack.c.l.b16 %v673
  %v706 = vunpack.c.l.b16 %v674
  %v707 = vunpack.c.l.b16 %v675
  %v708 = vunpack.c.l.b16 %v676
  %v709 = vunpack.c.l.b16 %v677
  %v710 = vunpack.c.l.b16 %v678
  %v711 = vunpack.c.l.b16 %v679
  %v712 = vpack.c.b16 %v697, %v696
  %v713 = vpack.c.b16 %v699, %v698
  %v714 = vpack.c.b16 %v701, %v700
  %v715 = vpack.c.b16 %v703, %v702
  %v716 = vpack.c.b16 %v705, %v704
  %v717 = vpack.c.b16 %v707, %v706
  %v718 = vpack.c.b16 %v709, %v708
  %v719 = vpack.c.b16 %v711, %v710
  %728 = vmatpush.bf16.msra.mxu0 %v719
  %729 = vmatpush.bf16.msra.mxu0 %v718
  %730 = vmatpush.bf16.msra.mxu0 %v717
  %731 = vmatpush.bf16.msra.mxu0 %v716
  %732 = vmatpush.bf16.msra.mxu0 %v715
  %733 = vmatpush.bf16.msra.mxu0 %v714
  %734 = vmatpush.bf16.msra.mxu0 %v713
  %735 = vmatpush.bf16.msra.mxu0 %v712
  %736 = vmatmul.bf16.gmra.mxu0 %v661
  %v737 = vpop.f32.mrf.mxu0
  %v738 = vadd.f32 0.0, %v737
  %v739 = vpop.f32.mrf.mxu0
  %v740 = vadd.f32 0.0, %v739
  %741 = vmatmul.bf16.gmra.mxu0 %v662
  %v742 = vpop.f32.mrf.mxu0
  %v743 = vadd.f32 0.0, %v742
  %v744 = vpop.f32.mrf.mxu0
  %v745 = vadd.f32 0.0, %v744
  %746 = vdwg.mxu0
  %v747 = vadd.f32 %v652, %v738
  %v748 = vadd.f32 %v654, %v740
  %v749 = vadd.f32 %v657, %v743
  %v750 = vadd.f32 %v659, %v745
  %v751 = vld [vmem:[%s5 + $0x2] sm:$0x1]
  %v752 = vld [vmem:[%s5 + $0x3] sm:$0x1]
  %v753 = vadd.f32 %v747, %v748
  %v754 = vadd.f32 %v753, %v749
  %v755 = vadd.f32 %v754, %v750
  %v756 = vrot.slane %v755, 4
  %v757 = vadd.f32 %v755, %v756
  %v758 = vrot.slane %v757, 2
  %v759 = vadd.f32 %v757, %v758
  %v760 = vrot.slane %v759, 1
  %v761 = vadd.f32 %v759, %v760
  %v762 = vmul.f32 %v747, %v747
  %v763 = vmul.f32 %v748, %v748
  %v764 = vmul.f32 %v749, %v749
  %v765 = vmul.f32 %v750, %v750
  %v766 = vadd.f32 %v762, %v763
  %v767 = vadd.f32 %v766, %v764
  %v768 = vadd.f32 %v767, %v765
  %v769 = vrot.slane %v768, 4
  %v770 = vadd.f32 %v768, %v769
  %v771 = vrot.slane %v770, 2
  %v772 = vadd.f32 %v770, %v771
  %v773 = vrot.slane %v772, 1
  %v774 = vadd.f32 %v772, %v773
  %v775 = vsel %vm407, %v761, %v774
  %776 = vmatpush.msra.mxu0 %v49
  %777 = vmatpush.msra.mxu0 %v48
  %778 = vmatpush.msra.mxu0 %v47
  %779 = vmatpush.msra.mxu0 %v46
  %780 = vmatpush.msra.mxu0 %v45
  %781 = vmatpush.msra.mxu0 %v44
  %782 = vmatpush.msra.mxu0 %v43
  %783 = vmatpush.msra.mxu0 %v42
  %784 = vmatpush.msra.mxu0 %v41
  %785 = vmatpush.msra.mxu0 %v40
  %786 = vmatpush.msra.mxu0 %v39
  %787 = vmatpush.msra.mxu0 %v38
  %788 = vmatpush.msra.mxu0 %v37
  %789 = vmatpush.msra.mxu0 %v36
  %790 = vmatpush.msra.mxu0 %v35
  %791 = vmatpush.msra.mxu0 %v34
  %792 = vmatmul.f32.gmra.mxu0 %v775
  %v793 = vpop.f32.mrf.mxu0
  %v794 = vadd.f32 0.0, %v793
  %795 = vdwg.mxu0
  %v796 = vmul.f32 %v794, 0.001953125
  %v797 = vmul.f32 %v796, %v796
  %v799 = vrot.slane %v797, 7
  %v801 = vsub.f32 %v796, %v799
  %v802 = vadd.f32 %v801, 1e-05
  %v803 = vrsqrt.pop %v802
  %v804 = vmul.f32 %v803, %v802
  %v805 = vmul.f32 %v804, %v803
  %v806 = vmul.f32 0.5, %v805
  %v807 = vsub.f32 1.5, %v806
  %v808 = vmul.f32 %v803, %v807
  %vm809 = vweird.f32 %v802
  %vm810 = vweird.f32 %v803
  %vm811 = vmor %vm809, %vm810
  %v812 = vsel %vm811, %v803, %v808
  %v814 = vrot.slane %v812, 1
  %v816 = vmul.f32 %v751, %v814
  %v817 = vmul.f32 %v796, %v816
  %v818 = vsub.f32 %v752, %v817
  %v819 = vperm.slane %v816, 0
  %v820 = vmul.f32 %v747, %v819
  %v821 = vmul.f32 %v748, %v819
  %v822 = vmul.f32 %v749, %v819
  %v823 = vmul.f32 %v750, %v819
  %v824 = vperm.slane %v818, 0
  %v825 = vadd.f32 %v820, %v824
  %v826 = vadd.f32 %v821, %v824
  %v827 = vadd.f32 %v822, %v824
  %v828 = vadd.f32 %v823, %v824
  %v829 = vadd.f32 %v50, %v825
  %v830 = vadd.f32 %v51, %v826
  %v831 = vadd.f32 %v52, %v827
  %v832 = vadd.f32 %v53, %v828
  %833 = vst [vmem:[%s7] sm:$0xff] %v829
  %834 = vst [vmem:[%s7 + $0x8] sm:$0xff] %v830
  %835 = vst [vmem:[%s7 + $0x10] sm:$0xff] %v831
  %836 = vst [vmem:[%s7 + $0x18] sm:$0xff] %v832
  // Predicated region
  $region30: #{basic_block.1} parent=0 // pred_check
    _
  $region31: #{basic_block.1} parent=0 // pred_check_branch
    %838 = sbr.rel (0) target = $region33
  $region32: #{basic_block.1} parent=0 // pred_region
    _
  $region33: #{basic_block.1} parent=0 // pred_fallthru
    _
  // Predicated region
  $region34: #{basic_block.1} parent=0 // pred_check
    _
  $region35: #{basic_block.1} parent=0 // pred_check_branch
    %840 = sbr.rel (0) target = $region37
  $region36: #{basic_block.1} parent=0 // pred_region
    _
  $region37: #{basic_block.1} parent=0 // pred_fallthru
    _

</llo_original>
